<compile_context>
chip_gen: v6e
topology: v6e:2x2x1
jax: 0.10.0
libtpu: 0.0.40
codegen_flags: <defaults>
</compile_context>

<pallas_src>
import jax
import jax.numpy as jnp
from jax import lax
from jax.experimental import pallas as pl
from jax.experimental.pallas import tpu as pltpu


# ----------------------------- Pallas kernel ------------------------------ #
def _primary_caps_kernel(patches_ref, w_ref, b_ref, g_ref, out_ref):
    # patches_ref: (TM, K)   bf16 im2col rows (K = Cin*k*k, unpadded)
    # w_ref:       (K, Cp)   bf16 conv weights, Cout zero-padded to Cp
    # b_ref:       (1, Cp)   f32 bias (zero in padded columns)
    # g_ref:       (Cp, Cp)  f32 block-diagonal ones (D x D capsule groups)
    # out_ref:     (TM, Cp)  f32 lane-dense squashed output (Cout layout)
    conv = jnp.dot(patches_ref[...], w_ref[...],
                   preferred_element_type=jnp.float32)          # MXU (TM, Cp)
    conv = conv + b_ref[...]                                    # f32 bias add

    # Per-capsule squared norm, broadcast to every column of its group, in one
    # full-width MXU pass (block-diagonal G fuses group-sum + broadcast-back).
    sq = jnp.dot(conv * conv, g_ref[...],
                 preferred_element_type=jnp.float32)            # (TM, Cp)

    # squash: (||v||^2 / (1 + ||v||^2)) / sqrt(||v||^2 + eps), elementwise.
    inv_norm = lax.rsqrt(sq + 1e-8)                             # EUP slot
    factor = (sq / (1.0 + sq)) * inv_norm                       # (TM, Cp)

    out_ref[...] = (conv * factor).astype(out_ref.dtype)


# ------------------------------ host wrapper ------------------------------ #
def _round_up(a, b):
    return (a + b - 1) // b * b


def _choose_tm(M, target=1024):
    """M tile: big for HBM roofline, >=2 grid steps when possible (v7x 2 TCs),
    multiple of 8 sublanes.  At TM=1024 the double-buffered patches+output
    blocks are ~1.2 MiB f32, safely inside v7x's 32 MiB scoped-VMEM default."""
    return min(target, _round_up(max(pl.cdiv(M, 2), 8), 8))


def _im2col(x, k, stride, padding):
    """x: (B, Cin, H, W) NCHW -> patches (B, Ho*Wo, Cin*k*k)."""
    B, C, H, W = x.shape
    xp = jnp.pad(x, ((0, 0), (0, 0), (padding, padding), (padding, padding)))
    Ho = (H + 2 * padding - k) // stride + 1
    Wo = (W + 2 * padding - k) // stride + 1
    cols = []
    for ki in range(k):
        for kj in range(k):
            cols.append(xp[:, :, ki:ki + stride * Ho:stride,
                               kj:kj + stride * Wo:stride])     # (B, C, Ho, Wo)
    p = jnp.stack(cols, axis=2)                                 # (B, C, k*k, Ho, Wo)
    p = p.reshape(B, C * k * k, Ho * Wo)                        # idx = c*k*k + ki*k + kj
    p = p.transpose(0, 2, 1)                                    # (B, Ho*Wo, C*k*k)
    return p, Ho, Wo


def primary_capsules_forward(x, weight, bias, *, stride, padding,
                             num_capsules, capsule_dim,
                             operand_dtype=jnp.bfloat16):
    """x: (B, Cin, H, W); weight: (Cout, Cin, k, k); bias: (Cout,)."""
    B = x.shape[0]
    Cout, Cin, k, _ = weight.shape
    assert Cout == num_capsules * capsule_dim
    D = capsule_dim

    patches, Ho, Wo = _im2col(x, k, stride, padding)            # (B, HW, K)
    HW = Ho * Wo
    K = Cin * k * k
    M = B * HW

    LANE = 128
    TM = _choose_tm(M)
    Mp = _round_up(M, TM)
    Cp = _round_up(max(Cout, LANE), LANE)                       # 32 -> 128

    # K stays UNPADDED (full-dim block is legal); only pad rows of M.
    patches_p = jnp.pad(patches.reshape(M, K),
                        ((0, Mp - M), (0, 0))).astype(operand_dtype)
    w_p = jnp.pad(weight.reshape(Cout, K).T,
                  ((0, 0), (0, Cp - Cout))).astype(operand_dtype)
    b_p = jnp.pad(bias.reshape(1, Cout).astype(jnp.float32),
                  ((0, 0), (0, Cp - Cout)))

    # Block-diagonal ones (D x D blocks): one matmul does group-sum + broadcast.
    # Padded capsule groups see only zero conv columns -> sq = 0 -> factor = 0.
    col = jnp.arange(Cp)
    g = (col[:, None] // D == col[None, :] // D).astype(jnp.float32)  # (Cp, Cp)

    grid = (Mp // TM,)
    cost = pl.CostEstimate(
        flops=2 * Mp * K * Cp + 2 * Mp * Cp * Cp + 7 * Mp * Cp,
        transcendentals=Mp * Cp,
        bytes_accessed=(2 * Mp * K + 2 * K * Cp + 4 * Cp
                        + 4 * Cp * Cp + 4 * Mp * Cp),
    )

    out = pl.pallas_call(
        _primary_caps_kernel,
        out_shape=jax.ShapeDtypeStruct((Mp, Cp), jnp.float32),
        grid_spec=pltpu.PrefetchScalarGridSpec(
            num_scalar_prefetch=0,
            grid=grid,
            in_specs=[
                pl.BlockSpec((TM, K), lambda i: (i, 0)),        # streamed
                pl.BlockSpec((K, Cp), lambda i: (0, 0)),        # resident
                pl.BlockSpec((1, Cp), lambda i: (0, 0)),        # resident
                pl.BlockSpec((Cp, Cp), lambda i: (0, 0)),       # resident
            ],
            out_specs=pl.BlockSpec((TM, Cp), lambda i: (i, 0)),
        ),
        compiler_params=pltpu.CompilerParams(
            dimension_semantics=("parallel",)),
        cost_estimate=cost,
    )(patches_p, w_p, b_p, g)

    # Drop padding; the row-major reshape reproduces PyTorch's
    # view/permute/view ordering: out[b*HW+hw, nc*D+d] -> (b, hw*NC+nc, d).
    # (The column slice of the 128-wide buffer is a real copy on the host.)
    out = out[:M, :Cout].reshape(B, HW * num_capsules, capsule_dim)
    return out


# ------------------------------- reference -------------------------------- #
def _reference(x, weight, bias, *, stride, padding, num_capsules, capsule_dim):
    conv = lax.conv_general_dilated(
        x, weight, window_strides=(stride, stride),
        padding=[(padding, padding), (padding, padding)],
        dimension_numbers=("NCHW", "OIHW", "NCHW"))
    conv = conv + bias.reshape(1, -1, 1, 1)
    B, C, Ho, Wo = conv.shape
    out = conv.reshape(B, num_capsules, capsule_dim, Ho * Wo)
    out = jnp.transpose(out, (0, 3, 1, 2)).reshape(B, -1, capsule_dim)
    sq = jnp.sum(out * out, axis=-1, keepdims=True)
    scale = sq / (1.0 + sq)
    return scale * out / jnp.sqrt(sq + 1e-8)


# --------------------------------- main ------------------------------------ #
if __name__ == "__main__":
    # Module config (small, consistent with the forward):
    in_channels, out_channels = 4, 32
    kernel_size, stride, padding = 3, 2, 1
    num_capsules, capsule_dim = 4, 8          # 4 * 8 == out_channels

    B, H, W = 2, 16, 16

    key = jax.random.PRNGKey(0)
    kx, kw, kb = jax.random.split(key, 3)

    x = jax.random.normal(kx, (B, in_channels, H, W), dtype=jnp.float32)

    # Deterministic Conv2d-style init (uniform in +/- 1/sqrt(fan_in)).
    fan_in = in_channels * kernel_size * kernel_size
    bound = 1.0 / jnp.sqrt(jnp.float32(fan_in))
    weight = jax.random.uniform(kw, (out_channels, in_channels,
                                     kernel_size, kernel_size),
                                minval=-bound, maxval=bound, dtype=jnp.float32)
    bias = jax.random.uniform(kb, (out_channels,),
                              minval=-bound, maxval=bound, dtype=jnp.float32)

    out = primary_capsules_forward(
        x, weight, bias, stride=stride, padding=padding,
        num_capsules=num_capsules, capsule_dim=capsule_dim)
    out = jax.block_until_ready(out)

    ref = _reference(x, weight, bias, stride=stride, padding=padding,
                     num_capsules=num_capsules, capsule_dim=capsule_dim)
    assert out.shape == ref.shape == (B, 8 * 8 * num_capsules, capsule_dim)
    # bf16 matmul operands (f32 accumulate) -> loosened tolerance per review.
    assert jnp.allclose(out, ref, rtol=2e-2, atol=2e-2), (
        float(jnp.max(jnp.abs(out - ref))))

    print("KERNEL_OK")
</pallas_src>

<mosaic_0001>
module attributes {stable_mosaic.version = 11 : i64} {
  func.func @_primary_caps_kernel(%arg0: i32, %arg1: memref<64x36xbf16, #tpu.memory_space<vmem>>, %arg2: memref<36x128xbf16, #tpu.memory_space<vmem>>, %arg3: memref<1x128xf32, #tpu.memory_space<vmem>>, %arg4: memref<128x128xf32, #tpu.memory_space<vmem>>, %arg5: memref<64x128xf32, #tpu.memory_space<vmem>>) attributes {dimension_semantics = [#tpu.dimension_semantics<parallel>], iteration_bounds = array<i64: 2>, scalar_prefetch = 0 : i64, scratch_operands = 0 : i64, tpu.core_type = #tpu.core_type<tc>, window_params = [{transform_indices = @transform_0, window_bounds = array<i64: 64, 36>}, {pipeline_mode = #tpu.pipeline_mode<synchronous>, transform_indices = @transform_1, window_bounds = array<i64: 36, 128>}, {pipeline_mode = #tpu.pipeline_mode<synchronous>, transform_indices = @transform_2, window_bounds = array<i64: 1, 128>}, {pipeline_mode = #tpu.pipeline_mode<synchronous>, transform_indices = @transform_3, window_bounds = array<i64: 128, 128>}, {transform_indices = @transform_4, window_bounds = array<i64: 64, 128>}]} {
    %c0 = arith.constant 0 : index
    %c0_0 = arith.constant 0 : index
    %0 = vector.load %arg1[%c0, %c0_0] : memref<64x36xbf16, #tpu.memory_space<vmem>>, vector<64x36xbf16>
    %c0_1 = arith.constant 0 : index
    %c0_2 = arith.constant 0 : index
    %1 = vector.load %arg2[%c0_1, %c0_2] : memref<36x128xbf16, #tpu.memory_space<vmem>>, vector<36x128xbf16>
    %cst = arith.constant dense<0.000000e+00> : vector<64x128xf32>
    %2 = tpu.matmul %0, %1, %cst {dimension_numbers = #tpu.dot_dimension_numbers<[1], [0], [0], [1], [0, 0, 1, 1], [], []>} : vector<64x36xbf16>, vector<36x128xbf16>, vector<64x128xf32> -> vector<64x128xf32>
    %c0_3 = arith.constant 0 : index
    %c0_4 = arith.constant 0 : index
    %3 = vector.load %arg3[%c0_3, %c0_4] : memref<1x128xf32, #tpu.memory_space<vmem>>, vector<1x128xf32>
    %4 = vector.broadcast %3 : vector<1x128xf32> to vector<64x128xf32>
    %5 = arith.addf %2, %4 : vector<64x128xf32>
    %6 = arith.mulf %5, %5 : vector<64x128xf32>
    %c0_5 = arith.constant 0 : index
    %c0_6 = arith.constant 0 : index
    %7 = vector.load %arg4[%c0_5, %c0_6] : memref<128x128xf32, #tpu.memory_space<vmem>>, vector<128x128xf32>
    %cst_7 = arith.constant dense<0.000000e+00> : vector<64x128xf32>
    %8 = tpu.matmul %6, %7, %cst_7 {dimension_numbers = #tpu.dot_dimension_numbers<[1], [0], [0], [1], [0, 0, 1, 1], [], []>} : vector<64x128xf32>, vector<128x128xf32>, vector<64x128xf32> -> vector<64x128xf32>
    %cst_8 = arith.constant 9.99999993E-9 : f32
    %9 = vector.broadcast %cst_8 : f32 to vector<64x128xf32>
    %10 = arith.addf %8, %9 : vector<64x128xf32>
    %11 = math.rsqrt %10 : vector<64x128xf32>
    %cst_9 = arith.constant 1.000000e+00 : f32
    %12 = vector.broadcast %cst_9 : f32 to vector<64x128xf32>
    %13 = arith.addf %12, %8 : vector<64x128xf32>
    %14 = arith.divf %8, %13 : vector<64x128xf32>
    %15 = arith.mulf %14, %11 : vector<64x128xf32>
    %16 = arith.mulf %5, %15 : vector<64x128xf32>
    %c0_10 = arith.constant 0 : index
    %c0_11 = arith.constant 0 : index
    %17 = vector.load %arg5[%c0_10, %c0_11] : memref<64x128xf32, #tpu.memory_space<vmem>>, vector<64x128xf32>
    tpu.vector_store %arg5[%c0_10, %c0_11], %16 {strides = array<i32>} : memref<64x128xf32, #tpu.memory_space<vmem>>, vector<64x128xf32>,
    return
  }
  func.func @transform_0(%arg0: i32) -> (i32, i32) {
    %c0_i32 = arith.constant 0 : i32
    %c0_i32_0 = arith.constant 0 : i32
    return %arg0, %c0_i32 : i32, i32
  }
  func.func @transform_1(%arg0: i32) -> (i32, i32) {
    %c0_i32 = arith.constant 0 : i32
    %c0_i32_0 = arith.constant 0 : i32
    %c0_i32_1 = arith.constant 0 : i32
    return %c0_i32, %c0_i32_0 : i32, i32
  }
  func.func @transform_2(%arg0: i32) -> (i32, i32) {
    %c0_i32 = arith.constant 0 : i32
    %c0_i32_0 = arith.constant 0 : i32
    %c0_i32_1 = arith.constant 0 : i32
    return %c0_i32, %c0_i32_0 : i32, i32
  }
  func.func @transform_3(%arg0: i32) -> (i32, i32) {
    %c0_i32 = arith.constant 0 : i32
    %c0_i32_0 = arith.constant 0 : i32
    %c0_i32_1 = arith.constant 0 : i32
    return %c0_i32, %c0_i32_0 : i32, i32
  }
  func.func @transform_4(%arg0: i32) -> (i32, i32) {
    %c0_i32 = arith.constant 0 : i32
    %c0_i32_0 = arith.constant 0 : i32
    return %arg0, %c0_i32 : i32, i32
  }
}

</mosaic_0001>

<llo_original>
// kernel: tpu_custom_call.1
$region0: #{tpu_custom_call.1}
  #allocation0 [shape = 'u32[]', space=smem, size = 0x4, offset = 0x4, fixed_abs, tag = 'smem constant byte address 0x4 - core index']
  #allocation1 [shape = 'u32[144,128]{1,0:T(1,128)}', space=vmem, size = 0x12000, scoped, tag = 'internal scratch']
  %s0 = inlined_call_operand.vmem [shape: bf16[128,36], index: 0, kind: input, shape index: {}]
  %s1 = inlined_call_operand.vmem [shape: bf16[36,128], index: 1, kind: input, shape index: {}]
  %s2 = inlined_call_operand.vmem [shape: f32[1,128], index: 2, kind: input, shape index: {}]
  %s3 = inlined_call_operand.hbm [shape: f32[128,128], index: 3, kind: input, shape index: {}]
  %s4 = inlined_call_operand.hbm [shape: f32[128,128], index: 4, kind: output, shape index: {}]
  %s5 = sld [smem:[#allocation0]]
  $region53: #{tpu_custom_call.1} parent=0
    _
  %s7 = ssub.s32 1, %s5
  %s8 = scalar_select 0, %s7, %s5
  $region1: #{tpu_custom_call.1} parent=0
    #allocation2 [shape = 'u8[65536]{0}', space=vmem, size = 0x10000, scoped, tag = 'input window, operand 3, single buffered']
    #allocation3 [shape = 's32[2]{0}', space=sflag, size = 0x8, scoped, tag = 'scoped memory for tpu_custom_call.1']
    #allocation4 [shape = 's32[2]{0}', space=sflag, size = 0x8, scoped, tag = 'scoped memory for tpu_custom_call.1']
    #allocation5 [shape = 'u8[65536]{0}', space=vmem, size = 0x10000, scoped, tag = 'output window, operand 0']
    %9 = vsyncpa [#allocation3], 0
    %10 = vsyncpa [#allocation4], 0
    %s11 = scalar_lea.sflag [#allocation4], 1
    %12 = vsyncpa %s11, 0
    loop: start=0, step=1, limit=4
    $region2: #{tpu_custom_call.1} parent=1 // loop_pre_header
      _
    $region3: #{tpu_custom_call.1} parent=1 // loop_header
      %s14 = sphi 0, %s18
      %p15 = scmp.ge.s32.totalorder %s14, 4
      %s24 = sphi 0, %s26
      %s27 = sphi 0, %s24
      %s28 = sphi 0, %s27
      %s44 = sphi 0, %s28
      %s48 = sphi 0, %s48
      %s50 = sphi 0, %s48
      %s51 = sphi 0, %s50
      %s65 = sphi 0, %s51
      %s69 = sphi 0, %s69
      %s71 = sphi 0, %s69
      %s72 = sphi 0, %s71
      %s86 = sphi 0, %s72
      %s90 = sphi 0, %s90
      %s92 = sphi 0, %s90
      %s93 = sphi 0, %s92
      %s107 = sphi 0, %s93
      %s113 = sphi 0, %s115
      %s116 = sphi 0, %s113
      %s117 = sphi 0, %s116
      %s133 = sphi 0, %s117
    $region4: #{tpu_custom_call.1} parent=1 // loop_header_branch
      %17 = sbr.rel (%p15) target = $region8
    $region5: #{tpu_custom_call.1} parent=1 // loop_body
      %s19 = ssub.s32 %s14, 1
      %s20 = ssub.s32 %s14, 2
      %s21 = sadd.s32 %s14, 1
      %s22 = ssub.s32 %s14, %s21
      %p23 = scmp.eq.s32.totalorder %s22, 0
      %s25 = sadd.s32 %s24, 1
      %s26 = scalar_select %p23, %s24, %s25
      %p29 = pneg %p23
      %p30 = scmp.eq.s32.totalorder %s14, 1
      %p31 = por %p29, %p30
      %p32 = scmp.ne.s32.totalorder %s24, %s27
      %p33 = scmp.eq.s32.totalorder %s14, 0
      %p34 = por %p32, %p33
      %p35 = scmp.ne.s32.totalorder %s24, %s27
      %p36 = scmp.eq.s32.totalorder %s19, 1
      %p37 = por %p35, %p36
      %p38 = scmp.ne.s32.totalorder %s27, %s28
      %p39 = scmp.eq.s32.totalorder %s19, 0
      %p40 = por %p38, %p39
      %p41 = scmp.ne.s32.totalorder %s27, %s28
      %p42 = scmp.eq.s32.totalorder %s20, 1
      %p43 = por %p41, %p42
      %p45 = scmp.ne.s32.totalorder %s28, %s44
      %p46 = scmp.eq.s32.totalorder %s20, 0
      %p47 = por %p45, %p46
      %s49 = sadd.s32 %s48, 1
      %p52 = scmp.eq.s32.totalorder %s14, 1
      %p53 = scmp.ne.s32.totalorder %s48, %s50
      %p54 = scmp.eq.s32.totalorder %s14, 0
      %p55 = por %p53, %p54
      %p56 = scmp.ne.s32.totalorder %s48, %s50
      %p57 = scmp.eq.s32.totalorder %s19, 1
      %p58 = por %p56, %p57
      %p59 = scmp.ne.s32.totalorder %s50, %s51
      %p60 = scmp.eq.s32.totalorder %s19, 0
      %p61 = por %p59, %p60
      %p62 = scmp.ne.s32.totalorder %s50, %s51
      %p63 = scmp.eq.s32.totalorder %s20, 1
      %p64 = por %p62, %p63
      %p66 = scmp.ne.s32.totalorder %s51, %s65
      %p67 = scmp.eq.s32.totalorder %s20, 0
      %p68 = por %p66, %p67
      %s70 = sadd.s32 %s69, 1
      %p73 = scmp.eq.s32.totalorder %s14, 1
      %p74 = scmp.ne.s32.totalorder %s69, %s71
      %p75 = scmp.eq.s32.totalorder %s14, 0
      %p76 = por %p74, %p75
      %p77 = scmp.ne.s32.totalorder %s69, %s71
      %p78 = scmp.eq.s32.totalorder %s19, 1
      %p79 = por %p77, %p78
      %p80 = scmp.ne.s32.totalorder %s71, %s72
      %p81 = scmp.eq.s32.totalorder %s19, 0
      %p82 = por %p80, %p81
      %p83 = scmp.ne.s32.totalorder %s71, %s72
      %p84 = scmp.eq.s32.totalorder %s20, 1
      %p85 = por %p83, %p84
      %p87 = scmp.ne.s32.totalorder %s72, %s86
      %p88 = scmp.eq.s32.totalorder %s20, 0
      %p89 = por %p87, %p88
      %s91 = sadd.s32 %s90, 1
      %p94 = scmp.eq.s32.totalorder %s14, 1
      %p95 = scmp.ne.s32.totalorder %s90, %s92
      %p96 = scmp.eq.s32.totalorder %s14, 0
      %p97 = por %p95, %p96
      %p98 = scmp.ne.s32.totalorder %s90, %s92
      %p99 = scmp.eq.s32.totalorder %s19, 1
      %p100 = por %p98, %p99
      %p101 = scmp.ne.s32.totalorder %s92, %s93
      %p102 = scmp.eq.s32.totalorder %s19, 0
      %p103 = por %p101, %p102
      %p104 = scmp.ne.s32.totalorder %s92, %s93
      %p105 = scmp.eq.s32.totalorder %s20, 1
      %p106 = por %p104, %p105
      %p108 = scmp.ne.s32.totalorder %s93, %s107
      %p109 = scmp.eq.s32.totalorder %s20, 0
      %p110 = por %p108, %p109
      %s111 = ssub.s32 %s14, %s21
      %p112 = scmp.eq.s32.totalorder %s111, 0
      %s114 = sadd.s32 %s113, 1
      %s115 = scalar_select %p112, %s113, %s114
      %p118 = pneg %p112
      %p119 = scmp.eq.s32.totalorder %s14, 1
      %p120 = por %p118, %p119
      %p121 = scmp.ne.s32.totalorder %s113, %s116
      %p122 = scmp.eq.s32.totalorder %s14, 0
      %p123 = por %p121, %p122
      %p124 = scmp.ne.s32.totalorder %s113, %s116
      %p125 = scmp.eq.s32.totalorder %s19, 1
      %p126 = por %p124, %p125
      %p127 = scmp.ne.s32.totalorder %s116, %s117
      %p128 = scmp.eq.s32.totalorder %s19, 0
      %p129 = por %p127, %p128
      %p130 = scmp.ne.s32.totalorder %s116, %s117
      %p131 = scmp.eq.s32.totalorder %s20, 1
      %p132 = por %p130, %p131
      %p134 = scmp.ne.s32.totalorder %s117, %s133
      %p135 = scmp.eq.s32.totalorder %s20, 0
      %p136 = por %p134, %p135
      %p137 = scmp.le.s32.totalorder 1, %s14
      %p138 = scmp.lt.s32.totalorder %s14, 3
      %p139 = pnand %p137, %p138
      %p140 = pneg %p139
      // Predicated region
      $region9: #{tpu_custom_call.1} parent=5 // pred_check
        _
      $region10: #{tpu_custom_call.1} parent=5 // pred_check_branch
        %142 = sbr.rel (%p139) target = $region12
      $region11: #{tpu_custom_call.1} parent=5 // pred_region
        %s143 = ssub.s32 %s14, 1
        // Predicated region
        $region13: #{tpu_custom_call.1} parent=11 // pred_check
          %p144 = pneg %p61
        $region14: #{tpu_custom_call.1} parent=11 // pred_check_branch
          %146 = sbr.rel (%p144) target = $region16
        $region15: #{tpu_custom_call.1} parent=11 // pred_region
          _
        $region16: #{tpu_custom_call.1} parent=11 // pred_fallthru
          _
        // Predicated region
        $region17: #{tpu_custom_call.1} parent=11 // pred_check
          %p147 = pneg %p82
        $region18: #{tpu_custom_call.1} parent=11 // pred_check_branch
          %149 = sbr.rel (%p147) target = $region20
        $region19: #{tpu_custom_call.1} parent=11 // pred_region
          _
        $region20: #{tpu_custom_call.1} parent=11 // pred_fallthru
          _
        // Predicated region
        $region21: #{tpu_custom_call.1} parent=11 // pred_check
          %p150 = pneg %p103
        $region22: #{tpu_custom_call.1} parent=11 // pred_check_branch
          %152 = sbr.rel (%p150) target = $region24
        $region23: #{tpu_custom_call.1} parent=11 // pred_region
          %s154 = ssub.s32 2048, 2048
          %155 = vsyncadd [#allocation3], %s154
          %s156 = sshll.u32 [#allocation2], 4
          %s157 = int_to_ptr.vmem [resolvable:$true] %s156
          %162 = dma.hbm_to_vmem [thread:$0]  %s3, 2048, %s157, [#allocation3], 128, 128, 8
        $region24: #{tpu_custom_call.1} parent=11 // pred_fallthru
          _
      $region12: #{tpu_custom_call.1} parent=5 // pred_fallthru
        _
      %p163 = scmp.lt.s32.totalorder %s14, 2
      // Predicated region
      $region25: #{tpu_custom_call.1} parent=5 // pred_check
        %p164 = pneg %p163
      $region26: #{tpu_custom_call.1} parent=5 // pred_check_branch
        %166 = sbr.rel (%p164) target = $region28
      $region27: #{tpu_custom_call.1} parent=5 // pred_region
        // Predicated region
        $region29: #{tpu_custom_call.1} parent=27 // pred_check
          %p167 = pneg %p34
        $region30: #{tpu_custom_call.1} parent=27 // pred_check_branch
          %169 = sbr.rel (%p167) target = $region32
        $region31: #{tpu_custom_call.1} parent=27 // pred_region
          %s170 = smul.u32 8, %s14
          %p171 = scmp.lt.s32.totalorder %s170, 15
          %s172 = scalar_select %p171, %s170, 15
          %s173 = smul.addr %s172, 4
          %s174 = scalar_lea.vmem %s0, %s173
          %s175 = smul.u32 8, %s14
        $region32: #{tpu_custom_call.1} parent=27 // pred_fallthru
          _
      $region28: #{tpu_custom_call.1} parent=5 // pred_fallthru
        _
      %p176 = scmp.le.s32.totalorder 1, %s14
      %p177 = scmp.lt.s32.totalorder %s14, 3
      %p178 = pnand %p176, %p177
      %p179 = pneg %p178
      // Predicated region
      $region33: #{tpu_custom_call.1} parent=5 // pred_check
        _
      $region34: #{tpu_custom_call.1} parent=5 // pred_check_branch
        %181 = sbr.rel (%p178) target = $region36
      $region35: #{tpu_custom_call.1} parent=5 // pred_region
        %s182 = ssub.s32 %s14, 1
        // Predicated region
        $region37: #{tpu_custom_call.1} parent=35 // pred_check
          %p183 = pneg %p103
        $region38: #{tpu_custom_call.1} parent=35 // pred_check_branch
          %185 = sbr.rel (%p183) target = $region40
        $region39: #{tpu_custom_call.1} parent=35 // pred_region
          %186 = dma.done [#allocation3], 2048
        $region40: #{tpu_custom_call.1} parent=35 // pred_fallthru
          _
        %s187 = smul.u32 8, %s19
        %p188 = scmp.lt.s32.totalorder %s187, 15
        %s189 = scalar_select %p188, %s187, 15
        %s190 = smul.addr %s189, 4
        %s191 = scalar_lea.vmem %s0, %s190
        %p192 = pneg %p40
        %p193 = pneg %p37
        %p194 = pneg %p61
        %p195 = pneg %p58
        %p196 = pneg %p82
        %p197 = pneg %p79
        %p198 = pneg %p103
        %p199 = pneg %p100
        %p200 = pneg %p129
        %p201 = pneg %p126
        %s202 = sand.u32 %s116, 1
        %s203 = scalar_lea.sflag [#allocation4], %s202
        %s204 = sand.u32 %s116, 1
        %s205 = smul.addr %s204, 64
        %s206 = scalar_lea.vmem [#allocation5], %s205
        %s207 = smul.u32 8, %s19
        %p208 = scmp.lt.s32.totalorder %s207, 15
        %s209 = scalar_select %p208, %s207, 15
        %s210 = smul.addr %s209, 4
        %s211 = scalar_lea.vmem %s0, %s210
        %s212 = smul.u32 8, %s19
        %s213 = smul.u32 8, %s19
        %v215 = vld [vmem:[%s211] sm:$0xf]
        %v216 = vld [vmem:[%s211 + $0x4] sm:$0xf]
        %v217 = vld [vmem:[%s211 + $0x8] sm:$0xf]
        %v218 = vld [vmem:[%s211 + $0xc] sm:$0xf]
        %v219 = vld [vmem:[%s211 + $0x10] sm:$0xf]
        %v220 = vld [vmem:[%s211 + $0x14] sm:$0xf]
        %v221 = vld [vmem:[%s211 + $0x18] sm:$0xf]
        %v222 = vld [vmem:[%s211 + $0x1c] sm:$0xf]
        %v223 = vld [vmem:[%s1] sm:$0xf]
        %v224 = vld [vmem:[%s1 + $0x4] sm:$0xf]
        %v225 = vld [vmem:[%s1 + $0x8] sm:$0xf]
        %v226 = vld [vmem:[%s1 + $0xc] sm:$0xf]
        %v227 = vld [vmem:[%s1 + $0x10] sm:$0x3]
        %v228 = vld [vmem:[%s2] sm:$0x1]
        %v230 = vlaneseq
        %v231 = vshrl.u32 %v230, 7
        %v232 = vsub.s32 0, %v231
        %v233 = vrot.slane %v228, %v232
        %v243 = vunpack.c.l.b16 %v215
        %v244 = vunpack.c.l.b16 %v216
        %v245 = vunpack.c.l.b16 %v217
        %v246 = vunpack.c.l.b16 %v218
        %v247 = vunpack.c.l.b16 %v219
        %v248 = vunpack.c.l.b16 %v220
        %v249 = vunpack.c.l.b16 %v221
        %v250 = vunpack.c.l.b16 %v222
        %v251 = vpack.c.b16 %v244, %v243
        %v252 = vpack.c.b16 %v246, %v245
        %v253 = vpack.c.b16 %v248, %v247
        %v254 = vpack.c.b16 %v250, %v249
        %v260 = vunpack.c.l.b16 %v223
        %v261 = vunpack.c.l.b16 %v224
        %v262 = vunpack.c.l.b16 %v225
        %v263 = vunpack.c.l.b16 %v226
        %v264 = vunpack.c.l.b16 %v227
        %v265 = vpack.c.b16 %v261, %v260
        %v266 = vpack.c.b16 %v263, %v262
        %v267 = vpack.c.b16 %v264, %v264
        %vm270 = vcmask 293888
        %v272 = vsel %vm270, %v251, 0
        %v275 = vsel %vm270, %v252, 0
        %v278 = vsel %vm270, %v253, 0
        %v281 = vsel %vm270, %v254, 0
        %vm283 = vcmask 1041408
        %v285 = vsel %vm283, %v267, 0
        %287 = vmatprep.subr.bf16.mxu0 0
        %288 = vmatpush1.bf16.msra.mxu0 0
        %289 = vmatprep.subr.bf16.mxu0 0
        %290 = vmatpush1.bf16.msra.mxu0 0
        %291 = vmatprep.subr.bf16.mxu0 0
        %292 = vmatpush1.bf16.msra.mxu0 0
        %293 = vmatprep.subr.bf16.mxu0 0
        %294 = vmatpush1.bf16.msra.mxu0 0
        %295 = vmatprep.subr.bf16.mxu0 0
        %296 = vmatpush1.bf16.msra.mxu0 0
        %297 = vmatprep.subr.bf16.mxu0 0
        %298 = vmatpush1.bf16.msra.mxu0 %v285
        %299 = vmatprep.subr.bf16.mxu0 0
        %300 = vmatpush1.bf16.msra.mxu0 %v266
        %301 = vmatprep.subr.bf16.mxu0 0
        %302 = vmatpush1.bf16.msra.mxu0 %v265
        %303 = vmatprep.subr.bf16.mxu0 0
        %304 = vmatpush2.bf16.msra.mxu0 0
        %305 = vmatprep.subr.bf16.mxu0 0
        %306 = vmatpush2.bf16.msra.mxu0 0
        %307 = vmatprep.subr.bf16.mxu0 0
        %308 = vmatpush2.bf16.msra.mxu0 0
        %309 = vmatprep.subr.bf16.mxu0 0
        %310 = vmatpush2.bf16.msra.mxu0 0
        %311 = vmatprep.subr.bf16.mxu0 0
        %312 = vmatpush2.bf16.msra.mxu0 0
        %313 = vmatprep.subr.bf16.mxu0 0
        %314 = vmatpush2.bf16.msra.mxu0 0
        %315 = vmatprep.subr.bf16.mxu0 0
        %316 = vmatpush2.bf16.msra.mxu0 0
        %317 = vmatprep.subr.bf16.mxu0 0
        %318 = vmatpush2.bf16.msra.mxu0 0
        %319 = vmatprep.mubr.bf16.mxu0 0
        %320 = vmatmul.mubr.bf16.gmra.mxu0 %v272
        %v321 = vpop.f32.mrf.mxu0
        %v322 = vadd.f32 %v233, %v321
        %v323 = vpop.f32.mrf.mxu0
        %v324 = vpop.f32.mrf.mxu0
        %v325 = vadd.f32 %v233, %v324
        %v326 = vpop.f32.mrf.mxu0
        %327 = vmatprep.mubr.bf16.mxu0 0
        %328 = vmatmul.mubr.bf16.gmra.mxu0 %v275
        %v329 = vpop.f32.mrf.mxu0
        %v330 = vadd.f32 %v233, %v329
        %v331 = vpop.f32.mrf.mxu0
        %v332 = vpop.f32.mrf.mxu0
        %v333 = vadd.f32 %v233, %v332
        %v334 = vpop.f32.mrf.mxu0
        %335 = vmatprep.mubr.bf16.mxu0 0
        %336 = vmatmul.mubr.bf16.gmra.mxu0 %v278
        %v337 = vpop.f32.mrf.mxu0
        %v338 = vadd.f32 %v233, %v337
        %v339 = vpop.f32.mrf.mxu0
        %v340 = vpop.f32.mrf.mxu0
        %v341 = vadd.f32 %v233, %v340
        %v342 = vpop.f32.mrf.mxu0
        %343 = vmatprep.mubr.bf16.mxu0 0
        %344 = vmatmul.mubr.bf16.gmra.mxu0 %v281
        %v345 = vpop.f32.mrf.mxu0
        %v346 = vadd.f32 %v233, %v345
        %v347 = vpop.f32.mrf.mxu0
        %v348 = vpop.f32.mrf.mxu0
        %v349 = vadd.f32 %v233, %v348
        %v350 = vpop.f32.mrf.mxu0
        %351 = vdwg.mxu0
        %v352 = vmul.f32 %v322, %v322
        %v353 = vmul.f32 %v325, %v325
        %v354 = vmul.f32 %v330, %v330
        %v355 = vmul.f32 %v333, %v333
        %v356 = vmul.f32 %v338, %v338
        %v357 = vmul.f32 %v341, %v341
        %v358 = vmul.f32 %v346, %v346
        %v359 = vmul.f32 %v349, %v349
        %v360 = vld [vmem:[#allocation2] sm:$0xff]
        %v361 = vld [vmem:[#allocation2 + $0x8] sm:$0xff]
        %v362 = vld [vmem:[#allocation2 + $0x10] sm:$0xff]
        %v363 = vld [vmem:[#allocation2 + $0x18] sm:$0xff]
        %v364 = vld [vmem:[#allocation2 + $0x20] sm:$0xff]
        %v365 = vld [vmem:[#allocation2 + $0x28] sm:$0xff]
        %v366 = vld [vmem:[#allocation2 + $0x30] sm:$0xff]
        %v367 = vld [vmem:[#allocation2 + $0x38] sm:$0xff]
        %v368 = vld [vmem:[#allocation2 + $0x40] sm:$0xff]
        %v369 = vld [vmem:[#allocation2 + $0x48] sm:$0xff]
        %v370 = vld [vmem:[#allocation2 + $0x50] sm:$0xff]
        %v371 = vld [vmem:[#allocation2 + $0x58] sm:$0xff]
        %v372 = vld [vmem:[#allocation2 + $0x60] sm:$0xff]
        %v373 = vld [vmem:[#allocation2 + $0x68] sm:$0xff]
        %v374 = vld [vmem:[#allocation2 + $0x70] sm:$0xff]
        %v375 = vld [vmem:[#allocation2 + $0x78] sm:$0xff]
        %376 = vmatprep.subr.mxu0 0.0
        %377 = vmatpush1.msra.mxu0 %v375
        %378 = vmatprep.subr.mxu0 0.0
        %379 = vmatpush1.msra.mxu0 %v374
        %380 = vmatprep.subr.mxu0 0.0
        %381 = vmatpush1.msra.mxu0 %v373
        %382 = vmatprep.subr.mxu0 0.0
        %383 = vmatpush1.msra.mxu0 %v372
        %384 = vmatprep.subr.mxu0 0.0
        %385 = vmatpush1.msra.mxu0 %v371
        %386 = vmatprep.subr.mxu0 0.0
        %387 = vmatpush1.msra.mxu0 %v370
        %388 = vmatprep.subr.mxu0 0.0
        %389 = vmatpush1.msra.mxu0 %v369
        %390 = vmatprep.subr.mxu0 0.0
        %391 = vmatpush1.msra.mxu0 %v368
        %392 = vmatprep.subr.mxu0 0.0
        %393 = vmatpush1.msra.mxu0 %v367
        %394 = vmatprep.subr.mxu0 0.0
        %395 = vmatpush1.msra.mxu0 %v366
        %396 = vmatprep.subr.mxu0 0.0
        %397 = vmatpush1.msra.mxu0 %v365
        %398 = vmatprep.subr.mxu0 0.0
        %399 = vmatpush1.msra.mxu0 %v364
        %400 = vmatprep.subr.mxu0 0.0
        %401 = vmatpush1.msra.mxu0 %v363
        %402 = vmatprep.subr.mxu0 0.0
        %403 = vmatpush1.msra.mxu0 %v362
        %404 = vmatprep.subr.mxu0 0.0
        %405 = vmatpush1.msra.mxu0 %v361
        %406 = vmatprep.subr.mxu0 0.0
        %407 = vmatpush1.msra.mxu0 %v360
        %408 = vmatprep.subr.mxu0 0.0
        %409 = vmatpush2.msra.mxu0 0.0
        %410 = vmatprep.subr.mxu0 0.0
        %411 = vmatpush2.msra.mxu0 0.0
        %412 = vmatprep.subr.mxu0 0.0
        %413 = vmatpush2.msra.mxu0 0.0
        %414 = vmatprep.subr.mxu0 0.0
        %415 = vmatpush2.msra.mxu0 0.0
        %416 = vmatprep.subr.mxu0 0.0
        %417 = vmatpush2.msra.mxu0 0.0
        %418 = vmatprep.subr.mxu0 0.0
        %419 = vmatpush2.msra.mxu0 0.0
        %420 = vmatprep.subr.mxu0 0.0
        %421 = vmatpush2.msra.mxu0 0.0
        %422 = vmatprep.subr.mxu0 0.0
        %423 = vmatpush2.msra.mxu0 0.0
        %424 = vmatprep.subr.mxu0 0.0
        %425 = vmatpush2.msra.mxu0 0.0
        %426 = vmatprep.subr.mxu0 0.0
        %427 = vmatpush2.msra.mxu0 0.0
        %428 = vmatprep.subr.mxu0 0.0
        %429 = vmatpush2.msra.mxu0 0.0
        %430 = vmatprep.subr.mxu0 0.0
        %431 = vmatpush2.msra.mxu0 0.0
        %432 = vmatprep.subr.mxu0 0.0
        %433 = vmatpush2.msra.mxu0 0.0
        %434 = vmatprep.subr.mxu0 0.0
        %435 = vmatpush2.msra.mxu0 0.0
        %436 = vmatprep.subr.mxu0 0.0
        %437 = vmatpush2.msra.mxu0 0.0
        %438 = vmatprep.subr.mxu0 0.0
        %439 = vmatpush2.msra.mxu0 0.0
        %440 = vmatprep.mubr.f32.mxu0 0.0
        %441 = vmatmul.mubr.f32.gmra.mxu0 %v352
        %v442 = vpop.f32.mrf.mxu0
        %v443 = vadd.f32 0.0, %v442
        %v444 = vpop.f32.mrf.mxu0
        %445 = vmatprep.mubr.f32.mxu0 0.0
        %446 = vmatmul.mubr.f32.gmra.mxu0 %v353
        %v447 = vpop.f32.mrf.mxu0
        %v448 = vadd.f32 0.0, %v447
        %v449 = vpop.f32.mrf.mxu0
        %450 = vmatprep.mubr.f32.mxu0 0.0
        %451 = vmatmul.mubr.f32.gmra.mxu0 %v354
        %v452 = vpop.f32.mrf.mxu0
        %v453 = vadd.f32 0.0, %v452
        %v454 = vpop.f32.mrf.mxu0
        %455 = vmatprep.mubr.f32.mxu0 0.0
        %456 = vmatmul.mubr.f32.gmra.mxu0 %v355
        %v457 = vpop.f32.mrf.mxu0
        %v458 = vadd.f32 0.0, %v457
        %v459 = vpop.f32.mrf.mxu0
        %460 = vmatprep.mubr.f32.mxu0 0.0
        %461 = vmatmul.mubr.f32.gmra.mxu0 %v356
        %v462 = vpop.f32.mrf.mxu0
        %v463 = vadd.f32 0.0, %v462
        %v464 = vpop.f32.mrf.mxu0
        %465 = vmatprep.mubr.f32.mxu0 0.0
        %466 = vmatmul.mubr.f32.gmra.mxu0 %v357
        %v467 = vpop.f32.mrf.mxu0
        %v468 = vadd.f32 0.0, %v467
        %v469 = vpop.f32.mrf.mxu0
        %470 = vmatprep.mubr.f32.mxu0 0.0
        %471 = vmatmul.mubr.f32.gmra.mxu0 %v358
        %v472 = vpop.f32.mrf.mxu0
        %v473 = vadd.f32 0.0, %v472
        %v474 = vpop.f32.mrf.mxu0
        %475 = vmatprep.mubr.f32.mxu0 0.0
        %476 = vmatmul.mubr.f32.gmra.mxu0 %v359
        %v477 = vpop.f32.mrf.mxu0
        %v478 = vadd.f32 0.0, %v477
        %v479 = vpop.f32.mrf.mxu0
        %480 = vdwg.mxu0
        %v481 = vadd.f32 %v443, 1e-08
        %v482 = vadd.f32 %v448, 1e-08
        %v483 = vadd.f32 %v453, 1e-08
        %v484 = vadd.f32 %v458, 1e-08
        %v485 = vadd.f32 %v463, 1e-08
        %v486 = vadd.f32 %v468, 1e-08
        %v487 = vadd.f32 %v473, 1e-08
        %v488 = vadd.f32 %v478, 1e-08
        %v489 = vrsqrt.pop %v481
        %v490 = vrsqrt.pop %v482
        %v491 = vrsqrt.pop %v483
        %v492 = vrsqrt.pop %v484
        %v493 = vrsqrt.pop %v485
        %v494 = vrsqrt.pop %v486
        %v495 = vrsqrt.pop %v487
        %v496 = vrsqrt.pop %v488
        %v497 = vadd.f32 %v443, 1.0
        %v498 = vadd.f32 %v448, 1.0
        %v499 = vadd.f32 %v453, 1.0
        %v500 = vadd.f32 %v458, 1.0
        %v501 = vadd.f32 %v463, 1.0
        %v502 = vadd.f32 %v468, 1.0
        %v503 = vadd.f32 %v473, 1.0
        %v504 = vadd.f32 %v478, 1.0
        %v505 = vrcp.pop %v497
        %v506 = vmul.f32 %v443, %v505
        %v507 = vrcp.pop %v498
        %v508 = vmul.f32 %v448, %v507
        %v509 = vrcp.pop %v499
        %v510 = vmul.f32 %v453, %v509
        %v511 = vrcp.pop %v500
        %v512 = vmul.f32 %v458, %v511
        %v513 = vrcp.pop %v501
        %v514 = vmul.f32 %v463, %v513
        %v515 = vrcp.pop %v502
        %v516 = vmul.f32 %v468, %v515
        %v517 = vrcp.pop %v503
        %v518 = vmul.f32 %v473, %v517
        %v519 = vrcp.pop %v504
        %v520 = vmul.f32 %v478, %v519
        %v521 = vmul.f32 %v506, %v489
        %v522 = vmul.f32 %v508, %v490
        %v523 = vmul.f32 %v510, %v491
        %v524 = vmul.f32 %v512, %v492
        %v525 = vmul.f32 %v514, %v493
        %v526 = vmul.f32 %v516, %v494
        %v527 = vmul.f32 %v518, %v495
        %v528 = vmul.f32 %v520, %v496
        %v529 = vmul.f32 %v322, %v521
        %v530 = vmul.f32 %v325, %v522
        %v531 = vmul.f32 %v330, %v523
        %v532 = vmul.f32 %v333, %v524
        %v533 = vmul.f32 %v338, %v525
        %v534 = vmul.f32 %v341, %v526
        %v535 = vmul.f32 %v346, %v527
        %v536 = vmul.f32 %v349, %v528
        %537 = vst [vmem:[%s206] sm:$0xff] %v529
        %538 = vst [vmem:[%s206 + $0x8] sm:$0xff] %v530
        %539 = vst [vmem:[%s206 + $0x10] sm:$0xff] %v531
        %540 = vst [vmem:[%s206 + $0x18] sm:$0xff] %v532
        %541 = vst [vmem:[%s206 + $0x20] sm:$0xff] %v533
        %542 = vst [vmem:[%s206 + $0x28] sm:$0xff] %v534
        %543 = vst [vmem:[%s206 + $0x30] sm:$0xff] %v535
        %544 = vst [vmem:[%s206 + $0x38] sm:$0xff] %v536
        %s545 = sand.u32 %s116, 1
        %s546 = scalar_lea.sflag [#allocation4], %s545
        %s547 = sand.u32 %s116, 1
        %s548 = smul.addr %s547, 64
        %s549 = scalar_lea.vmem [#allocation5], %s548
        // Predicated region
        $region41: #{tpu_custom_call.1} parent=35 // pred_check
          %p550 = pneg %p126
        $region42: #{tpu_custom_call.1} parent=35 // pred_check_branch
          %552 = sbr.rel (%p550) target = $region44
        $region43: #{tpu_custom_call.1} parent=35 // pred_region
          %s553 = smul.u32 8, %s19
          %s555 = ssub.s32 1024, 1024
          %556 = vsyncadd %s546, %s555
          %s557 = smul.addr %s553, 128
          %s558 = scalar_lea.hbm %s4, %s557
          %s559 = sshll.u32 %s549, 4
          %s560 = int_to_ptr.vmem [resolvable:$true] %s559
          %565 = dma.vmem_to_hbm [thread:$0]  %s560, 1024, %s558, %s546, 128, 128, 8
        $region44: #{tpu_custom_call.1} parent=35 // pred_fallthru
          _
      $region36: #{tpu_custom_call.1} parent=5 // pred_fallthru
        _
      %p566 = scmp.le.s32.totalorder 2, %s14
      // Predicated region
      $region45: #{tpu_custom_call.1} parent=5 // pred_check
        %p567 = pneg %p566
      $region46: #{tpu_custom_call.1} parent=5 // pred_check_branch
        %569 = sbr.rel (%p567) target = $region48
      $region47: #{tpu_custom_call.1} parent=5 // pred_region
        %s570 = ssub.s32 %s14, 2
        // Predicated region
        $region49: #{tpu_custom_call.1} parent=47 // pred_check
          %p571 = pneg %p132
        $region50: #{tpu_custom_call.1} parent=47 // pred_check_branch
          %573 = sbr.rel (%p571) target = $region52
        $region51: #{tpu_custom_call.1} parent=47 // pred_region
          %s574 = sand.u32 %s117, 1
          %s575 = scalar_lea.sflag [#allocation4], %s574
          %s576 = sand.u32 %s117, 1
          %s577 = smul.addr %s576, 64
          %s578 = scalar_lea.vmem [#allocation5], %s577
          %579 = dma.done %s575, 1024
        $region52: #{tpu_custom_call.1} parent=47 // pred_fallthru
          _
      $region48: #{tpu_custom_call.1} parent=5 // pred_fallthru
        _
    $region6: #{tpu_custom_call.1} parent=1 // loop_footer
      %s18 = sadd.s32 1, %s14
    $region7: #{tpu_custom_call.1} parent=1 // loop_footer_branch
      %13 = sbr.rel target = $region3
    $region8: #{tpu_custom_call.1} parent=1 // loop_exit
      _
    %580 = vsyncpa [#allocation3], 1
    %s581 = scalar_lea.sflag [#allocation3], 1
    %582 = vsyncpa %s581, 1
    %583 = vsyncpa [#allocation4], 1
    %s584 = scalar_lea.sflag [#allocation4], 1
    %585 = vsyncpa %s584, 1

</llo_original>
